<compile_context>
chip_gen: v6e
topology: v6e:2x2x1
jax: 0.10.0
libtpu: 0.0.40
codegen_flags: <defaults>
</compile_context>

<pallas_src>
import jax
import jax.numpy as jnp
from jax.experimental import pallas as pl
from jax.experimental.pallas import tpu as pltpu


def _round_up(x: int, m: int) -> int:
    return ((x + m - 1) // m) * m


def _mlp_kernel(w1_ref, w2_ref, x_ref, o_ref):
    # w1_ref: (3, 3) f32 in SMEM, w2_ref: (3, 1) f32 in SMEM (scalar weights).
    # x_ref:  (3, TR, L) f32 in VMEM -- one dense (TR, L) slab per input feature.
    # o_ref:  (TR, L) f32 in VMEM.
    x0 = x_ref[0]
    x1 = x_ref[1]
    x2 = x_ref[2]

    # Hidden layer: h[j] = sigmoid( sum_k W1[k, j] * x[k] )  (VPU FMAs + EUP).
    h0 = jax.nn.sigmoid(w1_ref[0, 0] * x0 + w1_ref[1, 0] * x1 + w1_ref[2, 0] * x2)
    h1 = jax.nn.sigmoid(w1_ref[0, 1] * x0 + w1_ref[1, 1] * x1 + w1_ref[2, 1] * x2)
    h2 = jax.nn.sigmoid(w1_ref[0, 2] * x0 + w1_ref[1, 2] * x1 + w1_ref[2, 2] * x2)

    # Output layer: o = sigmoid( sum_j W2[j, 0] * h[j] )
    o_ref[...] = jax.nn.sigmoid(
        w2_ref[0, 0] * h0 + w2_ref[1, 0] * h1 + w2_ref[2, 0] * h2
    )


def neural_network_forward(x, w1, w2, *, lane_width=512, rows_per_tile=512):
    """x: (B, 3) f32, w1: (3, 3) f32, w2: (3, 1) f32 -> (B, 1) f32."""
    B, in_size = x.shape
    hid = w1.shape[1]
    out_size = w2.shape[1]
    assert in_size == 3 and hid == 3 and out_size == 1
    assert lane_width % 128 == 0

    x = x.astype(jnp.float32)
    w1 = w1.astype(jnp.float32)
    w2 = w2.astype(jnp.float32)

    # Pad the batch only to the tile *granule* (8 sublanes x lane_width lanes),
    # never to a multiple of the full tile, so dead work stays bounded by the
    # granule no matter how large rows_per_tile is.
    granule = 8 * lane_width
    bp = _round_up(B, granule)
    rows = bp // lane_width  # multiple of 8

    # Feature-major, lane/sublane-dense planes: (3, rows, L).
    # TODO(synk): if the producer can emit X feature-major, this transpose/pad
    # (a small XLA-side layout op) can be dropped entirely.
    x_t = jnp.transpose(x)  # (3, B)
    if bp != B:
        x_t = jnp.pad(x_t, ((0, 0), (0, bp - B)))
    x_planes = x_t.reshape(in_size, rows, lane_width)

    tr = min(rows_per_tile, rows)
    tr = max(8, (tr // 8) * 8)  # sublane-aligned tile rows
    grid = (pl.cdiv(rows, tr),)

    out_planes = pl.pallas_call(
        _mlp_kernel,
        out_shape=jax.ShapeDtypeStruct((rows, lane_width), jnp.float32),
        grid=grid,
        in_specs=[
            pl.BlockSpec(memory_space=pltpu.MemorySpace.SMEM),  # W1 (3,3) scalars
            pl.BlockSpec(memory_space=pltpu.MemorySpace.SMEM),  # W2 (3,1) scalars
            pl.BlockSpec((in_size, tr, lane_width), lambda i: (0, i, 0)),
        ],
        out_specs=pl.BlockSpec((tr, lane_width), lambda i: (i, 0)),
        compiler_params=pltpu.CompilerParams(
            dimension_semantics=("parallel",),  # shard batch tiles across TCs
            vmem_limit_bytes=32 * 1024 * 1024,  # explicit; safe on v5e/v6e/v7x
        ),
        cost_estimate=pl.CostEstimate(
            flops=20 * bp, transcendentals=4 * bp, bytes_accessed=16 * bp
        ),
    )(w1, w2, x_planes)

    # Drop padded elements and restore the module's (B, 1) convention.
    return out_planes.reshape(-1)[:B].reshape(B, out_size)


def reference_forward(x, w1, w2):
    z2 = jax.nn.sigmoid(x @ w1)
    return jax.nn.sigmoid(z2 @ w2)


if __name__ == "__main__":
    key = jax.random.PRNGKey(0)
    kx, kw1, kw2 = jax.random.split(key, 3)

    batch, input_size, hidden_size, output_size = 8, 3, 3, 1

    # Module scales inputs into [0, 1]; emulate with uniform inputs.
    x = jax.random.uniform(kx, (batch, input_size), dtype=jnp.float32)
    # W1, W2 ~ randn, as in __init__ (deterministic here via PRNGKey(0)).
    w1 = jax.random.normal(kw1, (input_size, hidden_size), dtype=jnp.float32)
    w2 = jax.random.normal(kw2, (hidden_size, output_size), dtype=jnp.float32)

    out = neural_network_forward(x, w1, w2)
    jax.block_until_ready(out)

    ref = reference_forward(x, w1, w2)
    assert out.shape == (batch, output_size)
    assert jnp.allclose(out, ref, atol=1e-5, rtol=1e-5)

    # Second check: multi-tile grid with a ragged last block (edge masking).
    x2 = jax.random.uniform(
        jax.random.PRNGKey(1), (2500, input_size), dtype=jnp.float32
    )
    out2 = neural_network_forward(x2, w1, w2, lane_width=128, rows_per_tile=16)
    jax.block_until_ready(out2)
    ref2 = reference_forward(x2, w1, w2)
    assert out2.shape == (2500, output_size)
    assert jnp.allclose(out2, ref2, atol=1e-5, rtol=1e-5)

    print("KERNEL_OK")
</pallas_src>

<mosaic_0001>
module attributes {stable_mosaic.version = 11 : i64} {
  func.func @_mlp_kernel(%arg0: i32, %arg1: memref<3x3xf32, #tpu.memory_space<smem>>, %arg2: memref<3x1xf32, #tpu.memory_space<smem>>, %arg3: memref<3x8x512xf32, #tpu.memory_space<vmem>>, %arg4: memref<8x512xf32, #tpu.memory_space<vmem>>) attributes {dimension_semantics = [#tpu.dimension_semantics<parallel>], iteration_bounds = array<i64: 1>, scalar_prefetch = 0 : i64, scratch_operands = 0 : i64, tpu.core_type = #tpu.core_type<tc>, window_params = [{transform_indices = @transform_0, window_bounds = array<i64: 3, 3>}, {transform_indices = @transform_1, window_bounds = array<i64: 3, 1>}, {transform_indices = @transform_2, window_bounds = array<i64: 3, 8, 512>}, {transform_indices = @transform_3, window_bounds = array<i64: 8, 512>}]} {
    %c0 = arith.constant 0 : index
    %c0_0 = arith.constant 0 : index
    %c0_1 = arith.constant 0 : index
    %0 = vector.load %arg3[%c0, %c0_0, %c0_1] : memref<3x8x512xf32, #tpu.memory_space<vmem>>, vector<1x8x512xf32>
    %1 = vector.shape_cast %0 : vector<1x8x512xf32> to vector<8x512xf32>
    %c1 = arith.constant 1 : index
    %c0_2 = arith.constant 0 : index
    %c0_3 = arith.constant 0 : index
    %2 = vector.load %arg3[%c1, %c0_2, %c0_3] : memref<3x8x512xf32, #tpu.memory_space<vmem>>, vector<1x8x512xf32>
    %3 = vector.shape_cast %2 : vector<1x8x512xf32> to vector<8x512xf32>
    %c2 = arith.constant 2 : index
    %c0_4 = arith.constant 0 : index
    %c0_5 = arith.constant 0 : index
    %4 = vector.load %arg3[%c2, %c0_4, %c0_5] : memref<3x8x512xf32, #tpu.memory_space<vmem>>, vector<1x8x512xf32>
    %5 = vector.shape_cast %4 : vector<1x8x512xf32> to vector<8x512xf32>
    %c0_6 = arith.constant 0 : index
    %c0_7 = arith.constant 0 : index
    %6 = memref.load %arg1[%c0_6, %c0_7] : memref<3x3xf32, #tpu.memory_space<smem>>
    %7 = vector.broadcast %6 : f32 to vector<8x512xf32>
    %8 = arith.mulf %7, %1 : vector<8x512xf32>
    %c1_8 = arith.constant 1 : index
    %c0_9 = arith.constant 0 : index
    %9 = memref.load %arg1[%c1_8, %c0_9] : memref<3x3xf32, #tpu.memory_space<smem>>
    %10 = vector.broadcast %9 : f32 to vector<8x512xf32>
    %11 = arith.mulf %10, %3 : vector<8x512xf32>
    %12 = arith.addf %8, %11 : vector<8x512xf32>
    %c2_10 = arith.constant 2 : index
    %c0_11 = arith.constant 0 : index
    %13 = memref.load %arg1[%c2_10, %c0_11] : memref<3x3xf32, #tpu.memory_space<smem>>
    %14 = vector.broadcast %13 : f32 to vector<8x512xf32>
    %15 = arith.mulf %14, %5 : vector<8x512xf32>
    %16 = arith.addf %12, %15 : vector<8x512xf32>
    %17 = arith.negf %16 : vector<8x512xf32>
    %18 = math.exp %17 : vector<8x512xf32>
    %cst = arith.constant 1.000000e+00 : f32
    %19 = vector.broadcast %cst : f32 to vector<8x512xf32>
    %20 = arith.addf %19, %18 : vector<8x512xf32>
    %21 = arith.divf %19, %20 : vector<8x512xf32>
    %c0_12 = arith.constant 0 : index
    %c1_13 = arith.constant 1 : index
    %22 = memref.load %arg1[%c0_12, %c1_13] : memref<3x3xf32, #tpu.memory_space<smem>>
    %23 = vector.broadcast %22 : f32 to vector<8x512xf32>
    %24 = arith.mulf %23, %1 : vector<8x512xf32>
    %c1_14 = arith.constant 1 : index
    %c1_15 = arith.constant 1 : index
    %25 = memref.load %arg1[%c1_14, %c1_15] : memref<3x3xf32, #tpu.memory_space<smem>>
    %26 = vector.broadcast %25 : f32 to vector<8x512xf32>
    %27 = arith.mulf %26, %3 : vector<8x512xf32>
    %28 = arith.addf %24, %27 : vector<8x512xf32>
    %c2_16 = arith.constant 2 : index
    %c1_17 = arith.constant 1 : index
    %29 = memref.load %arg1[%c2_16, %c1_17] : memref<3x3xf32, #tpu.memory_space<smem>>
    %30 = vector.broadcast %29 : f32 to vector<8x512xf32>
    %31 = arith.mulf %30, %5 : vector<8x512xf32>
    %32 = arith.addf %28, %31 : vector<8x512xf32>
    %33 = arith.negf %32 : vector<8x512xf32>
    %34 = math.exp %33 : vector<8x512xf32>
    %cst_18 = arith.constant 1.000000e+00 : f32
    %35 = vector.broadcast %cst_18 : f32 to vector<8x512xf32>
    %36 = arith.addf %35, %34 : vector<8x512xf32>
    %37 = arith.divf %35, %36 : vector<8x512xf32>
    %c0_19 = arith.constant 0 : index
    %c2_20 = arith.constant 2 : index
    %38 = memref.load %arg1[%c0_19, %c2_20] : memref<3x3xf32, #tpu.memory_space<smem>>
    %39 = vector.broadcast %38 : f32 to vector<8x512xf32>
    %40 = arith.mulf %39, %1 : vector<8x512xf32>
    %c1_21 = arith.constant 1 : index
    %c2_22 = arith.constant 2 : index
    %41 = memref.load %arg1[%c1_21, %c2_22] : memref<3x3xf32, #tpu.memory_space<smem>>
    %42 = vector.broadcast %41 : f32 to vector<8x512xf32>
    %43 = arith.mulf %42, %3 : vector<8x512xf32>
    %44 = arith.addf %40, %43 : vector<8x512xf32>
    %c2_23 = arith.constant 2 : index
    %c2_24 = arith.constant 2 : index
    %45 = memref.load %arg1[%c2_23, %c2_24] : memref<3x3xf32, #tpu.memory_space<smem>>
    %46 = vector.broadcast %45 : f32 to vector<8x512xf32>
    %47 = arith.mulf %46, %5 : vector<8x512xf32>
    %48 = arith.addf %44, %47 : vector<8x512xf32>
    %49 = arith.negf %48 : vector<8x512xf32>
    %50 = math.exp %49 : vector<8x512xf32>
    %cst_25 = arith.constant 1.000000e+00 : f32
    %51 = vector.broadcast %cst_25 : f32 to vector<8x512xf32>
    %52 = arith.addf %51, %50 : vector<8x512xf32>
    %53 = arith.divf %51, %52 : vector<8x512xf32>
    %c0_26 = arith.constant 0 : index
    %c0_27 = arith.constant 0 : index
    %54 = memref.load %arg2[%c0_26, %c0_27] : memref<3x1xf32, #tpu.memory_space<smem>>
    %55 = vector.broadcast %54 : f32 to vector<8x512xf32>
    %56 = arith.mulf %55, %21 : vector<8x512xf32>
    %c1_28 = arith.constant 1 : index
    %c0_29 = arith.constant 0 : index
    %57 = memref.load %arg2[%c1_28, %c0_29] : memref<3x1xf32, #tpu.memory_space<smem>>
    %58 = vector.broadcast %57 : f32 to vector<8x512xf32>
    %59 = arith.mulf %58, %37 : vector<8x512xf32>
    %60 = arith.addf %56, %59 : vector<8x512xf32>
    %c2_30 = arith.constant 2 : index
    %c0_31 = arith.constant 0 : index
    %61 = memref.load %arg2[%c2_30, %c0_31] : memref<3x1xf32, #tpu.memory_space<smem>>
    %62 = vector.broadcast %61 : f32 to vector<8x512xf32>
    %63 = arith.mulf %62, %53 : vector<8x512xf32>
    %64 = arith.addf %60, %63 : vector<8x512xf32>
    %65 = arith.negf %64 : vector<8x512xf32>
    %66 = math.exp %65 : vector<8x512xf32>
    %cst_32 = arith.constant 1.000000e+00 : f32
    %67 = vector.broadcast %cst_32 : f32 to vector<8x512xf32>
    %68 = arith.addf %67, %66 : vector<8x512xf32>
    %69 = arith.divf %67, %68 : vector<8x512xf32>
    %c0_33 = arith.constant 0 : index
    %c0_34 = arith.constant 0 : index
    %70 = vector.load %arg4[%c0_33, %c0_34] : memref<8x512xf32, #tpu.memory_space<vmem>>, vector<8x512xf32>
    tpu.vector_store %arg4[%c0_33, %c0_34], %69 {strides = array<i32>} : memref<8x512xf32, #tpu.memory_space<vmem>>, vector<8x512xf32>,
    return
  }
  func.func @transform_0(%arg0: i32) -> (i32, i32) {
    %c0_i32 = arith.constant 0 : i32
    %c0_i32_0 = arith.constant 0 : i32
    %c0_i32_1 = arith.constant 0 : i32
    return %c0_i32, %c0_i32_0 : i32, i32
  }
  func.func @transform_1(%arg0: i32) -> (i32, i32) {
    %c0_i32 = arith.constant 0 : i32
    %c0_i32_0 = arith.constant 0 : i32
    %c0_i32_1 = arith.constant 0 : i32
    return %c0_i32, %c0_i32_0 : i32, i32
  }
  func.func @transform_2(%arg0: i32) -> (i32, i32, i32) {
    %c0_i32 = arith.constant 0 : i32
    %c0_i32_0 = arith.constant 0 : i32
    %c0_i32_1 = arith.constant 0 : i32
    return %c0_i32, %arg0, %c0_i32_0 : i32, i32, i32
  }
  func.func @transform_3(%arg0: i32) -> (i32, i32) {
    %c0_i32 = arith.constant 0 : i32
    %c0_i32_0 = arith.constant 0 : i32
    return %arg0, %c0_i32 : i32, i32
  }
}

</mosaic_0001>

<llo_original>
// kernel: tpu_custom_call.1
$region0: #{tpu_custom_call.1}
  #allocation0 [shape = 'u32[]', space=smem, size = 0x4, offset = 0x4, fixed_abs, tag = 'smem constant byte address 0x4 - core index']
  #allocation1 [shape = 'u32[144,128]{1,0:T(1,128)}', space=vmem, size = 0x12000, scoped, tag = 'internal scratch']
  %s0 = inlined_call_operand.vmem [shape: f32[3,3], index: 0, kind: input, shape index: {}]
  %s1 = inlined_call_operand.vmem [shape: f32[3,1], index: 1, kind: input, shape index: {}]
  %s2 = inlined_call_operand.hbm [shape: f32[3,8,512], index: 2, kind: input, shape index: {}]
  %s3 = inlined_call_operand.hbm [shape: f32[8,512], index: 3, kind: output, shape index: {}]
  %s4 = sld [smem:[#allocation0]]
  $region34: #{tpu_custom_call.1} parent=0
    _
  %s6 = ssub.s32 1, %s4
  %s7 = scalar_select 0, %s6, %s4
  $region1: #{tpu_custom_call.1} parent=0
    #allocation2 [shape = 'u8[2048]{0}', space=smem, size = 0x800, scoped, tag = 'input window, operand 0, single buffered']
    #allocation3 [shape = 's32[1]{0}', space=sflag, size = 0x4, scoped, tag = 'scoped memory for tpu_custom_call.1']
    #allocation4 [shape = 's32[1]{0}', space=sflag, size = 0x4, scoped, tag = 'scoped memory for tpu_custom_call.1']
    #allocation5 [shape = 's32[1]{0}', space=sflag, size = 0x4, scoped, tag = 'scoped memory for tpu_custom_call.1']
    #allocation6 [shape = 'u8[2048]{0}', space=smem, size = 0x800, scoped, tag = 'input window, operand 1, single buffered']
    #allocation7 [shape = 's32[1]{0}', space=sflag, size = 0x4, scoped, tag = 'scoped memory for tpu_custom_call.1']
    #allocation8 [shape = 'u8[49152]{0}', space=vmem, size = 0xc000, scoped, tag = 'input window, operand 2, single buffered']
    #allocation9 [shape = 'u8[16384]{0}', space=vmem, size = 0x4000, scoped, tag = 'output window, operand 0, single buffered']
    %8 = vsyncpa [#allocation5], 0
    %9 = vsyncpa [#allocation7], 0
    %10 = vsyncpa [#allocation3], 0
    %11 = vsyncpa [#allocation4], 0
    // Predicated region
    $region2: #{tpu_custom_call.1} parent=1 // pred_check
      _
    $region3: #{tpu_custom_call.1} parent=1 // pred_check_branch
      %13 = sbr.rel (0) target = $region5
    $region4: #{tpu_custom_call.1} parent=1 // pred_region
      %s15 = ssub.s32 64, 64
      %16 = vsyncadd [#allocation5], %s15
      %s18 = sshll.u32 %s0, 4
      %s19 = int_to_ptr.vmem [resolvable:$true] %s18
      %21 = dma.vmem_to_smem %s19, 64, [#allocation2], [#allocation5]
    $region5: #{tpu_custom_call.1} parent=1 // pred_fallthru
      _
    // Predicated region
    $region6: #{tpu_custom_call.1} parent=1 // pred_check
      _
    $region7: #{tpu_custom_call.1} parent=1 // pred_check_branch
      %23 = sbr.rel (0) target = $region9
    $region8: #{tpu_custom_call.1} parent=1 // pred_region
      %s25 = ssub.s32 64, 64
      %26 = vsyncadd [#allocation7], %s25
      %s28 = sshll.u32 %s1, 4
      %s29 = int_to_ptr.vmem [resolvable:$true] %s28
      %31 = dma.vmem_to_smem %s29, 64, [#allocation6], [#allocation7]
    $region9: #{tpu_custom_call.1} parent=1 // pred_fallthru
      _
    // Predicated region
    $region10: #{tpu_custom_call.1} parent=1 // pred_check
      _
    $region11: #{tpu_custom_call.1} parent=1 // pred_check_branch
      %33 = sbr.rel (0) target = $region13
    $region12: #{tpu_custom_call.1} parent=1 // pred_region
      %s35 = ssub.s32 1536, 1536
      %36 = vsyncadd [#allocation3], %s35
      %s37 = sshll.u32 [#allocation8], 4
      %s38 = int_to_ptr.vmem [resolvable:$true] %s37
      %43 = dma.hbm_to_vmem [thread:$0]  %s2, 1536, %s38, [#allocation3], 512, 512, 32
    $region13: #{tpu_custom_call.1} parent=1 // pred_fallthru
      _
    // Predicated region
    $region14: #{tpu_custom_call.1} parent=1 // pred_check
      _
    $region15: #{tpu_custom_call.1} parent=1 // pred_check_branch
      %45 = sbr.rel (0) target = $region17
    $region16: #{tpu_custom_call.1} parent=1 // pred_region
      %46 = dma.done [#allocation5], 64
    $region17: #{tpu_custom_call.1} parent=1 // pred_fallthru
      _
    // Predicated region
    $region18: #{tpu_custom_call.1} parent=1 // pred_check
      _
    $region19: #{tpu_custom_call.1} parent=1 // pred_check_branch
      %48 = sbr.rel (0) target = $region21
    $region20: #{tpu_custom_call.1} parent=1 // pred_region
      %49 = dma.done [#allocation7], 64
    $region21: #{tpu_custom_call.1} parent=1 // pred_fallthru
      _
    // Predicated region
    $region22: #{tpu_custom_call.1} parent=1 // pred_check
      _
    $region23: #{tpu_custom_call.1} parent=1 // pred_check_branch
      %51 = sbr.rel (0) target = $region25
    $region24: #{tpu_custom_call.1} parent=1 // pred_region
      %52 = dma.done [#allocation3], 1536
    $region25: #{tpu_custom_call.1} parent=1 // pred_fallthru
      _
    %53 = sfence
    %v54 = vld [vmem:[#allocation8] sm:$0xff]
    %v55 = vld [vmem:[#allocation8 + $0x8] sm:$0xff]
    %v56 = vld [vmem:[#allocation8 + $0x10] sm:$0xff]
    %v57 = vld [vmem:[#allocation8 + $0x18] sm:$0xff]
    %s58 = scalar_lea.vmem [#allocation8], 32
    %v59 = vld [vmem:[%s58] sm:$0xff]
    %v60 = vld [vmem:[%s58 + $0x8] sm:$0xff]
    %v61 = vld [vmem:[%s58 + $0x10] sm:$0xff]
    %v62 = vld [vmem:[%s58 + $0x18] sm:$0xff]
    %s63 = scalar_lea.vmem [#allocation8], 64
    %v64 = vld [vmem:[%s63] sm:$0xff]
    %v65 = vld [vmem:[%s63 + $0x8] sm:$0xff]
    %v66 = vld [vmem:[%s63 + $0x10] sm:$0xff]
    %v67 = vld [vmem:[%s63 + $0x18] sm:$0xff]
    %s68 = sld [smem:[#allocation2]]
    %v69 = vstv %s68
    %v70 = vmul.f32 %v69, %v54
    %v71 = vmul.f32 %v69, %v55
    %v72 = vmul.f32 %v69, %v56
    %v73 = vmul.f32 %v69, %v57
    %s74 = sld [smem:[#allocation2 + $0x80]]
    %v75 = vstv %s74
    %v76 = vmul.f32 %v75, %v59
    %v77 = vmul.f32 %v75, %v60
    %v78 = vmul.f32 %v75, %v61
    %v79 = vmul.f32 %v75, %v62
    %v80 = vadd.f32 %v70, %v76
    %v81 = vadd.f32 %v71, %v77
    %v82 = vadd.f32 %v72, %v78
    %v83 = vadd.f32 %v73, %v79
    %s84 = sld [smem:[#allocation2 + $0x100]]
    %v85 = vstv %s84
    %v86 = vmul.f32 %v85, %v64
    %v87 = vmul.f32 %v85, %v65
    %v88 = vmul.f32 %v85, %v66
    %v89 = vmul.f32 %v85, %v67
    %v90 = vadd.f32 %v80, %v86
    %v91 = vadd.f32 %v81, %v87
    %v92 = vadd.f32 %v82, %v88
    %v93 = vadd.f32 %v83, %v89
    %v94 = vxor.u32 %v90, 2147483648
    %v95 = vxor.u32 %v91, 2147483648
    %v96 = vxor.u32 %v92, 2147483648
    %v97 = vxor.u32 %v93, 2147483648
    %v98 = vmul.f32 %v94, 1.442695
    %v99 = vpow.pop %v98
    %v100 = vmul.f32 %v95, 1.442695
    %v101 = vpow.pop %v100
    %v102 = vmul.f32 %v96, 1.442695
    %v103 = vpow.pop %v102
    %v104 = vmul.f32 %v97, 1.442695
    %v105 = vpow.pop %v104
    %v106 = vadd.f32 %v99, 1.0
    %v107 = vadd.f32 %v101, 1.0
    %v108 = vadd.f32 %v103, 1.0
    %v109 = vadd.f32 %v105, 1.0
    %v110 = vrcp.pop %v106
    %v111 = vmul.f32 1.0, %v110
    %v112 = vrcp.pop %v107
    %v113 = vmul.f32 1.0, %v112
    %v114 = vrcp.pop %v108
    %v115 = vmul.f32 1.0, %v114
    %v116 = vrcp.pop %v109
    %v117 = vmul.f32 1.0, %v116
    %s118 = sld [smem:[#allocation2 + $0x1]]
    %v119 = vstv %s118
    %v120 = vmul.f32 %v119, %v54
    %v121 = vmul.f32 %v119, %v55
    %v122 = vmul.f32 %v119, %v56
    %v123 = vmul.f32 %v119, %v57
    %s124 = sld [smem:[#allocation2 + $0x81]]
    %v125 = vstv %s124
    %v126 = vmul.f32 %v125, %v59
    %v127 = vmul.f32 %v125, %v60
    %v128 = vmul.f32 %v125, %v61
    %v129 = vmul.f32 %v125, %v62
    %v130 = vadd.f32 %v120, %v126
    %v131 = vadd.f32 %v121, %v127
    %v132 = vadd.f32 %v122, %v128
    %v133 = vadd.f32 %v123, %v129
    %s134 = sld [smem:[#allocation2 + $0x101]]
    %v135 = vstv %s134
    %v136 = vmul.f32 %v135, %v64
    %v137 = vmul.f32 %v135, %v65
    %v138 = vmul.f32 %v135, %v66
    %v139 = vmul.f32 %v135, %v67
    %v140 = vadd.f32 %v130, %v136
    %v141 = vadd.f32 %v131, %v137
    %v142 = vadd.f32 %v132, %v138
    %v143 = vadd.f32 %v133, %v139
    %v144 = vxor.u32 %v140, 2147483648
    %v145 = vxor.u32 %v141, 2147483648
    %v146 = vxor.u32 %v142, 2147483648
    %v147 = vxor.u32 %v143, 2147483648
    %v148 = vmul.f32 %v144, 1.442695
    %v149 = vpow.pop %v148
    %v150 = vmul.f32 %v145, 1.442695
    %v151 = vpow.pop %v150
    %v152 = vmul.f32 %v146, 1.442695
    %v153 = vpow.pop %v152
    %v154 = vmul.f32 %v147, 1.442695
    %v155 = vpow.pop %v154
    %v156 = vadd.f32 %v149, 1.0
    %v157 = vadd.f32 %v151, 1.0
    %v158 = vadd.f32 %v153, 1.0
    %v159 = vadd.f32 %v155, 1.0
    %v160 = vrcp.pop %v156
    %v161 = vmul.f32 1.0, %v160
    %v162 = vrcp.pop %v157
    %v163 = vmul.f32 1.0, %v162
    %v164 = vrcp.pop %v158
    %v165 = vmul.f32 1.0, %v164
    %v166 = vrcp.pop %v159
    %v167 = vmul.f32 1.0, %v166
    %s168 = sld [smem:[#allocation2 + $0x2]]
    %v169 = vstv %s168
    %v170 = vmul.f32 %v169, %v54
    %v171 = vmul.f32 %v169, %v55
    %v172 = vmul.f32 %v169, %v56
    %v173 = vmul.f32 %v169, %v57
    %s174 = sld [smem:[#allocation2 + $0x82]]
    %v175 = vstv %s174
    %v176 = vmul.f32 %v175, %v59
    %v177 = vmul.f32 %v175, %v60
    %v178 = vmul.f32 %v175, %v61
    %v179 = vmul.f32 %v175, %v62
    %v180 = vadd.f32 %v170, %v176
    %v181 = vadd.f32 %v171, %v177
    %v182 = vadd.f32 %v172, %v178
    %v183 = vadd.f32 %v173, %v179
    %s184 = sld [smem:[#allocation2 + $0x102]]
    %v185 = vstv %s184
    %v186 = vmul.f32 %v185, %v64
    %v187 = vmul.f32 %v185, %v65
    %v188 = vmul.f32 %v185, %v66
    %v189 = vmul.f32 %v185, %v67
    %v190 = vadd.f32 %v180, %v186
    %v191 = vadd.f32 %v181, %v187
    %v192 = vadd.f32 %v182, %v188
    %v193 = vadd.f32 %v183, %v189
    %v194 = vxor.u32 %v190, 2147483648
    %v195 = vxor.u32 %v191, 2147483648
    %v196 = vxor.u32 %v192, 2147483648
    %v197 = vxor.u32 %v193, 2147483648
    %v198 = vmul.f32 %v194, 1.442695
    %v199 = vpow.pop %v198
    %v200 = vmul.f32 %v195, 1.442695
    %v201 = vpow.pop %v200
    %v202 = vmul.f32 %v196, 1.442695
    %v203 = vpow.pop %v202
    %v204 = vmul.f32 %v197, 1.442695
    %v205 = vpow.pop %v204
    %v206 = vadd.f32 %v199, 1.0
    %v207 = vadd.f32 %v201, 1.0
    %v208 = vadd.f32 %v203, 1.0
    %v209 = vadd.f32 %v205, 1.0
    %v210 = vrcp.pop %v206
    %v211 = vmul.f32 1.0, %v210
    %v212 = vrcp.pop %v207
    %v213 = vmul.f32 1.0, %v212
    %v214 = vrcp.pop %v208
    %v215 = vmul.f32 1.0, %v214
    %v216 = vrcp.pop %v209
    %v217 = vmul.f32 1.0, %v216
    %s218 = sld [smem:[#allocation6]]
    %v219 = vstv %s218
    %v220 = vmul.f32 %v219, %v111
    %v221 = vmul.f32 %v219, %v113
    %v222 = vmul.f32 %v219, %v115
    %v223 = vmul.f32 %v219, %v117
    %s224 = sld [smem:[#allocation6 + $0x80]]
    %v225 = vstv %s224
    %v226 = vmul.f32 %v225, %v161
    %v227 = vmul.f32 %v225, %v163
    %v228 = vmul.f32 %v225, %v165
    %v229 = vmul.f32 %v225, %v167
    %v230 = vadd.f32 %v220, %v226
    %v231 = vadd.f32 %v221, %v227
    %v232 = vadd.f32 %v222, %v228
    %v233 = vadd.f32 %v223, %v229
    %s234 = sld [smem:[#allocation6 + $0x100]]
    %v235 = vstv %s234
    %v236 = vmul.f32 %v235, %v211
    %v237 = vmul.f32 %v235, %v213
    %v238 = vmul.f32 %v235, %v215
    %v239 = vmul.f32 %v235, %v217
    %v240 = vadd.f32 %v230, %v236
    %v241 = vadd.f32 %v231, %v237
    %v242 = vadd.f32 %v232, %v238
    %v243 = vadd.f32 %v233, %v239
    %v244 = vxor.u32 %v240, 2147483648
    %v245 = vxor.u32 %v241, 2147483648
    %v246 = vxor.u32 %v242, 2147483648
    %v247 = vxor.u32 %v243, 2147483648
    %v248 = vmul.f32 %v244, 1.442695
    %v249 = vpow.pop %v248
    %v250 = vmul.f32 %v245, 1.442695
    %v251 = vpow.pop %v250
    %v252 = vmul.f32 %v246, 1.442695
    %v253 = vpow.pop %v252
    %v254 = vmul.f32 %v247, 1.442695
    %v255 = vpow.pop %v254
    %v256 = vadd.f32 %v249, 1.0
    %v257 = vadd.f32 %v251, 1.0
    %v258 = vadd.f32 %v253, 1.0
    %v259 = vadd.f32 %v255, 1.0
    %v260 = vrcp.pop %v256
    %v261 = vmul.f32 1.0, %v260
    %v262 = vrcp.pop %v257
    %v263 = vmul.f32 1.0, %v262
    %v264 = vrcp.pop %v258
    %v265 = vmul.f32 1.0, %v264
    %v266 = vrcp.pop %v259
    %v267 = vmul.f32 1.0, %v266
    %268 = vst [vmem:[#allocation9] sm:$0xff] %v261
    %269 = vst [vmem:[#allocation9 + $0x8] sm:$0xff] %v263
    %270 = vst [vmem:[#allocation9 + $0x10] sm:$0xff] %v265
    %271 = vst [vmem:[#allocation9 + $0x18] sm:$0xff] %v267
    // Predicated region
    $region26: #{tpu_custom_call.1} parent=1 // pred_check
      _
    $region27: #{tpu_custom_call.1} parent=1 // pred_check_branch
      %273 = sbr.rel (0) target = $region29
    $region28: #{tpu_custom_call.1} parent=1 // pred_region
      %s275 = ssub.s32 512, 512
      %276 = vsyncadd [#allocation4], %s275
      %s278 = sshll.u32 [#allocation9], 4
      %s279 = int_to_ptr.vmem [resolvable:$true] %s278
      %281 = dma.vmem_to_hbm [thread:$0]  %s279, 512, %s3, [#allocation4]
    $region29: #{tpu_custom_call.1} parent=1 // pred_fallthru
      _
    // Predicated region
    $region30: #{tpu_custom_call.1} parent=1 // pred_check
      _
    $region31: #{tpu_custom_call.1} parent=1 // pred_check_branch
      %283 = sbr.rel (0) target = $region33
    $region32: #{tpu_custom_call.1} parent=1 // pred_region
      %284 = dma.done [#allocation4], 512
    $region33: #{tpu_custom_call.1} parent=1 // pred_fallthru
      _
    %285 = vsyncpa [#allocation3], 1
    %286 = vsyncpa [#allocation4], 1
    %287 = vsyncpa [#allocation5], 1
    %288 = vsyncpa [#allocation7], 1

</llo_original>
